<compile_context>
chip_gen: v6e
topology: v6e:2x2x1
jax: 0.10.0
libtpu: 0.0.40
codegen_flags: <defaults>
</compile_context>

<pallas_src>
import functools
import math

import jax
import jax.numpy as jnp
from jax import lax
from jax.experimental import pallas as pl
from jax.experimental.pallas import tpu as pltpu

TINY_EPSILON = 1e-8  # mirrors yamle.defaults.TINY_EPSILON

CLASSIFICATION_KEY = "classification"
SEGMENTATION_KEY = "segmentation"
TEXT_CLASSIFICATION_KEY = "text_classification"
REGRESSION_KEY = "regression"
DEPTH_ESTIMATION_KEY = "depth_estimation"
RECONSTRUCTION_KEY = "reconstruction"

# Below this class count, (rows, C) blocks waste >= 4x of every vreg (exp on
# padding lanes + masked stores), so we switch to the sublane-reduce layout.
_SMALL_CLASS_DIM = 32


def _cdiv(a, b):
    return -(-a // b)


def _tpu_generation_info():
    """(physical_vmem_bytes, tensorcores_per_chip) with safe fallbacks."""
    vmem = None
    try:
        info = pltpu.get_tpu_info()
        for name in ("vmem_capacity_bytes", "vmem_bytes", "vmem_size_bytes"):
            v = getattr(info, name, None)
            if v:
                vmem = int(v)
                break
    except Exception:
        pass
    kind = ""
    try:
        kind = jax.devices()[0].device_kind.lower()
    except Exception:
        pass
    cores = 2 if ("v7" in kind or "7x" in kind) else 1
    if vmem is not None and vmem <= (64 << 20):
        # 64 MiB VMEM per TensorCore is the v7x-class signature (2 TCs/chip).
        cores = max(cores, 2)
    if vmem is None:
        vmem = 64 << 20  # conservative default: valid on every generation
    return vmem, cores


def _block_budget_bytes(vmem_bytes):
    # One input + one output block, each double-buffered => ~4x block bytes
    # resident.  Keep that under ~VMEM/4 (=> ~8 MiB/block on v5e/v6e, ~4 MiB
    # on v7x).
    return max(1 << 20, vmem_bytes // 16)


def _compiler_params(grid_rank, vmem_bytes):
    return pltpu.CompilerParams(
        dimension_semantics=("parallel",) * grid_rank,
        vmem_limit_bytes=int(vmem_bytes // 2),
    )


def _pick_tile(extent, unit_bytes, budget_bytes, granule, min_steps=1):
    """Largest tile along one axis with tile*unit_bytes <= budget, a multiple
    of `granule` (or the full extent), preferring >= min_steps grid steps when
    the extent allows it (min_steps > 1 only on multi-TensorCore chips)."""
    extent = int(extent)
    by_budget = max(1, budget_bytes // max(1, unit_bytes))
    by_split = _cdiv(extent, max(1, min_steps))
    tile = min(extent, by_budget, by_split)
    if tile >= extent:
        return extent
    tile = max(granule, (tile // granule) * granule)
    return min(tile, extent)


# ---------------------------------------------------------------------------
# Kernels (everything fused into a single VMEM pass)
# ---------------------------------------------------------------------------
def _softmax_kernel(x_ref, o_ref, *, axis):
    x = x_ref[...].astype(jnp.float32)
    x = jnp.where(jnp.isfinite(x), x, TINY_EPSILON)   # nan/+inf/-inf -> eps
    x = jnp.clip(x, -50.0, 50.0)
    m = jnp.max(x, axis=axis, keepdims=True)
    e = jnp.exp(x - m)
    s = jnp.sum(e, axis=axis, keepdims=True)
    # s >= 1 so the softmax is finite; the reference's second nan_to_num is a
    # no-op and only the final clamp is kept.
    p = e * pl.reciprocal(s)                          # exact (approx=False)
    o_ref[...] = jnp.clip(p, TINY_EPSILON, 1.0 + TINY_EPSILON).astype(o_ref.dtype)


def _regression_kernel(x_ref, o_ref, *, channel_axis):
    # [mean, var] pairs; index 1 along `channel_axis` (or odd lane parity for
    # the flattened layout) is the variance, the mean passes through untouched.
    x = x_ref[...].astype(jnp.float32)
    v = jnp.where(jnp.isfinite(x), x, 0.0)
    v = jnp.clip(v, -6.0, 1.0)
    v = jnp.maximum(jnp.exp(v), TINY_EPSILON)
    idx = lax.broadcasted_iota(jnp.int32, x.shape, channel_axis)
    out = jnp.where((idx & 1) == 1, v, x)
    o_ref[...] = out.astype(o_ref.dtype)


# ---------------------------------------------------------------------------
# Wrappers (layout plumbing lives here, not in the kernels)
# ---------------------------------------------------------------------------
def _softmax_output(x, dim):
    dim = dim % x.ndim
    shape = x.shape
    d = int(shape[dim])
    pre = math.prod(shape[:dim])
    post = math.prod(shape[dim + 1:])

    vmem, cores = _tpu_generation_info()
    budget = _block_budget_bytes(vmem)
    cost = pl.CostEstimate(flops=10 * x.size, transcendentals=x.size,
                           bytes_accessed=x.size * (x.dtype.itemsize + 4))

    if post == 1 and d >= _SMALL_CLASS_DIM:
        # Trailing softmax dim, wide enough to fill the lanes: block
        # (row_tile, d), reduce over the lane axis.
        rows = pre
        x2 = x.reshape(rows, d)
        row_tile = _pick_tile(rows, d * 4, budget, 8, cores)
        grid = (_cdiv(rows, row_tile),)
        out = pl.pallas_call(
            functools.partial(_softmax_kernel, axis=-1),
            out_shape=jax.ShapeDtypeStruct((rows, d), jnp.float32),
            grid_spec=pl.GridSpec(
                grid=grid,
                in_specs=[pl.BlockSpec((row_tile, d), lambda i: (i, 0))],
                out_specs=pl.BlockSpec((row_tile, d), lambda i: (i, 0)),
            ),
            compiler_params=_compiler_params(len(grid), vmem),
            cost_estimate=cost,
        )(x2)
        return out.reshape(shape)

    if post == 1:
        # Small class count (e.g. C=2 or 10): (rows, C) blocks would pad every
        # vreg to 128 lanes (exp on padding, masked vst).  Put the rows on the
        # lanes instead (classes on sublanes) and reduce over sublanes; the two
        # XLA-level transposes are cheap relative to the 128/C in-kernel waste.
        rows = pre
        xt = x.reshape(rows, d).T                     # (d, rows), lane-dense
        lane_tile = _pick_tile(rows, d * 4, budget, 128, cores)
        grid = (_cdiv(rows, lane_tile),)
        out = pl.pallas_call(
            functools.partial(_softmax_kernel, axis=-2),
            out_shape=jax.ShapeDtypeStruct((d, rows), jnp.float32),
            grid_spec=pl.GridSpec(
                grid=grid,
                in_specs=[pl.BlockSpec((d, lane_tile), lambda i: (0, i))],
                out_specs=pl.BlockSpec((d, lane_tile), lambda i: (0, i)),
            ),
            compiler_params=_compiler_params(len(grid), vmem),
            cost_estimate=cost,
        )(xt)
        return out.T.reshape(shape)

    # Softmax over a middle dim (e.g. NCHW segmentation, dim=1): flatten the
    # trailing dims onto the lane axis, fold the batch dims into the block, and
    # reduce over the channel axis on sublanes.  lane_tile is a multiple of 128
    # (ragged tail masked by Pallas) so blocks never exceed the byte budget.
    x3 = x.reshape(pre, d, post)
    lane_tile = _pick_tile(post, d * 4, budget, 128, 1)
    pre_tile = _pick_tile(pre, d * lane_tile * 4, budget, 1, 1)
    if cores > 1 and _cdiv(pre, pre_tile) * _cdiv(post, lane_tile) < cores:
        if pre >= cores:
            pre_tile = _pick_tile(pre, d * lane_tile * 4, budget, 1, cores)
        elif post > 128:
            lane_tile = _pick_tile(post, d * 4, budget, 128, cores)
    grid = (_cdiv(pre, pre_tile), _cdiv(post, lane_tile))
    out = pl.pallas_call(
        functools.partial(_softmax_kernel, axis=-2),
        out_shape=jax.ShapeDtypeStruct((pre, d, post), jnp.float32),
        grid_spec=pl.GridSpec(
            grid=grid,
            in_specs=[pl.BlockSpec((pre_tile, d, lane_tile),
                                   lambda i, j: (i, 0, j))],
            out_specs=pl.BlockSpec((pre_tile, d, lane_tile),
                                   lambda i, j: (i, 0, j)),
        ),
        compiler_params=_compiler_params(len(grid), vmem),
        cost_estimate=cost,
    )(x3)
    return out.reshape(shape)


def _regression_output(x, dim):
    dim = dim % x.ndim
    shape = x.shape
    pre = math.prod(shape[:dim])
    post = math.prod(shape[dim + 1:])

    vmem, cores = _tpu_generation_info()
    budget = _block_budget_bytes(vmem)
    cost = pl.CostEstimate(flops=6 * x.size, transcendentals=x.size,
                           bytes_accessed=2 * x.size * x.dtype.itemsize)

    if post == 1:
        rows = pre
        total = rows * 2
        width = next((w for w in (2048, 1024, 512, 256, 128) if total % w == 0), 0)
        if width:
            # Lane-dense flat view: [mean, var] pairs packed along the lanes;
            # the variance is every odd lane.  No moveaxis / transpose at all.
            x2 = x.reshape(total // width, width)
            row_tile = _pick_tile(x2.shape[0], width * 4, budget, 8, cores)
            grid = (_cdiv(x2.shape[0], row_tile),)
            spec = pl.BlockSpec((row_tile, width), lambda i: (i, 0))
        else:
            # Tiny / oddly-sized fallback: (row_tile, 2) blocks (correct, only
            # hit when the flat size is not a multiple of 128).
            x2 = x.reshape(rows, 2)
            row_tile = _pick_tile(rows, 2 * 4, budget, 8, cores)
            grid = (_cdiv(rows, row_tile),)
            spec = pl.BlockSpec((row_tile, 2), lambda i: (i, 0))
        out = pl.pallas_call(
            functools.partial(_regression_kernel, channel_axis=1),
            out_shape=jax.ShapeDtypeStruct(x2.shape, x.dtype),
            grid_spec=pl.GridSpec(grid=grid, in_specs=[spec], out_specs=spec),
            compiler_params=_compiler_params(len(grid), vmem),
            cost_estimate=cost,
        )(x2)
        return out.reshape(shape)

    # [mean, var] axis in the middle (e.g. (N, 2, H, W) depth maps): flatten
    # the trailing dims onto the lanes; the variance channel is selected
    # in-kernel — no moveaxis round trips before/after the pallas_call.
    x3 = x.reshape(pre, 2, post)
    lane_tile = _pick_tile(post, 2 * 4, budget, 128, 1)
    pre_tile = _pick_tile(pre, 2 * lane_tile * 4, budget, 1, 1)
    if cores > 1 and _cdiv(pre, pre_tile) * _cdiv(post, lane_tile) < cores:
        if pre >= cores:
            pre_tile = _pick_tile(pre, 2 * lane_tile * 4, budget, 1, cores)
        elif post > 128:
            lane_tile = _pick_tile(post, 2 * 4, budget, 128, cores)
    grid = (_cdiv(pre, pre_tile), _cdiv(post, lane_tile))
    spec = pl.BlockSpec((pre_tile, 2, lane_tile), lambda i, j: (i, 0, j))
    out = pl.pallas_call(
        functools.partial(_regression_kernel, channel_axis=1),
        out_shape=jax.ShapeDtypeStruct((pre, 2, post), x.dtype),
        grid_spec=pl.GridSpec(grid=grid, in_specs=[spec], out_specs=spec),
        compiler_params=_compiler_params(len(grid), vmem),
        cost_estimate=cost,
    )(x3)
    return out.reshape(shape)


def output_activation(x, task, dim=None):
    """JAX/Pallas equivalent of yamle output_activation(x, task, dim)."""
    dim = 1 if dim is None else dim
    if task in (CLASSIFICATION_KEY, SEGMENTATION_KEY, TEXT_CLASSIFICATION_KEY):
        return _softmax_output(x, dim)
    elif task in (REGRESSION_KEY, DEPTH_ESTIMATION_KEY, RECONSTRUCTION_KEY):
        if x.shape[dim] == 2:
            return _regression_output(x, dim)
        return x
    else:
        raise ValueError(f"Task {task} is not supported.")


class OutputActivation:
    """Mirror of the PyTorch module (task dispatch / enable flag are host-side)."""

    def __init__(self, task, dim=None):
        self._task = task
        self._dim = 1 if dim is None else dim
        self._enable = True

    def __call__(self, x):
        if self._enable:
            return output_activation(x, self._task, self._dim)
        return x

    def enable(self):
        self._enable = True

    def disable(self):
        self._enable = False


# ---------------------------------------------------------------------------
# Plain-JAX references (for correctness checks only)
# ---------------------------------------------------------------------------
def _reference_softmax(x, dim):
    x = jnp.where(jnp.isfinite(x), x, TINY_EPSILON)
    x = jnp.clip(x, -50.0, 50.0)
    p = jax.nn.softmax(x.astype(jnp.float32), axis=dim)
    p = jnp.where(jnp.isfinite(p), p, TINY_EPSILON)
    return jnp.clip(p, TINY_EPSILON, 1.0 + TINY_EPSILON)


def _reference_regression(x, dim):
    if x.shape[dim] != 2:
        return x
    mean = lax.index_in_dim(x, 0, axis=dim, keepdims=True)
    var = lax.index_in_dim(x, 1, axis=dim, keepdims=True)
    var = jnp.where(jnp.isfinite(var), var, 0.0)
    var = jnp.clip(var, -6.0, 1.0)
    var = jnp.maximum(jnp.exp(var), TINY_EPSILON)
    return jnp.concatenate([mean, var], axis=dim)


if __name__ == "__main__":
    root = jax.random.PRNGKey(0)
    k1, k2, k3, k4, k5 = jax.random.split(root, 5)

    # --- classification: (16, 128); wide class axis -> lane-reduce path ---
    x1 = 10.0 * jax.random.normal(k1, (16, 128), dtype=jnp.float32)
    x1 = x1.at[0, 0].set(jnp.nan).at[1, 3].set(jnp.inf).at[2, 7].set(-jnp.inf)
    o1 = jax.block_until_ready(OutputActivation(CLASSIFICATION_KEY)(x1))
    r1 = _reference_softmax(x1, 1)
    assert o1.shape == x1.shape and o1.dtype == jnp.float32
    assert jnp.allclose(o1, r1, atol=1e-6, rtol=1e-5), float(jnp.max(jnp.abs(o1 - r1)))

    # --- text classification: (32, 8); small class count -> sublane-reduce path ---
    x2 = 5.0 * jax.random.normal(k2, (32, 8), dtype=jnp.float32)
    o2 = jax.block_until_ready(output_activation(x2, TEXT_CLASSIFICATION_KEY, 1))
    r2 = _reference_softmax(x2, 1)
    assert jnp.allclose(o2, r2, atol=1e-6, rtol=1e-5), float(jnp.max(jnp.abs(o2 - r2)))

    # --- segmentation: NCHW (2, 4, 16, 16), softmax over channels (dim=1) ---
    x3 = 5.0 * jax.random.normal(k3, (2, 4, 16, 16), dtype=jnp.float32)
    o3 = jax.block_until_ready(output_activation(x3, SEGMENTATION_KEY))
    r3 = _reference_softmax(x3, 1)
    assert jnp.allclose(o3, r3, atol=1e-6, rtol=1e-5), float(jnp.max(jnp.abs(o3 - r3)))

    # --- regression: (64, 2) -> lane-parity kernel (no moveaxis) ---
    x4 = jax.random.normal(k4, (64, 2), dtype=jnp.float32)
    x4 = x4.at[0, 1].set(jnp.nan)      # NaN in the variance column
    o4 = jax.block_until_ready(output_activation(x4, REGRESSION_KEY))
    r4 = _reference_regression(x4, 1)
    assert o4.shape == x4.shape
    assert jnp.allclose(o4, r4, atol=1e-6, rtol=1e-5), float(jnp.max(jnp.abs(o4 - r4)))

    # --- depth estimation: (2, 2, 8, 16), [mean,var] axis in the middle ---
    x5 = jax.random.normal(k5, (2, 2, 8, 16), dtype=jnp.float32)
    o5 = jax.block_until_ready(output_activation(x5, DEPTH_ESTIMATION_KEY))
    r5 = _reference_regression(x5, 1)
    assert jnp.allclose(o5, r5, atol=1e-6, rtol=1e-5), float(jnp.max(jnp.abs(o5 - r5)))

    print("KERNEL_OK")
</pallas_src>

<mosaic_0001>
module attributes {stable_mosaic.version = 11 : i64} {
  func.func @_softmax_kernel(%arg0: i32, %arg1: memref<16x128xf32, #tpu.memory_space<vmem>>, %arg2: memref<16x128xf32, #tpu.memory_space<vmem>>) attributes {dimension_semantics = [#tpu.dimension_semantics<parallel>], iteration_bounds = array<i64: 1>, scalar_prefetch = 0 : i64, scratch_operands = 0 : i64, tpu.core_type = #tpu.core_type<tc>, window_params = [{transform_indices = @transform_0, window_bounds = array<i64: 16, 128>}, {transform_indices = @transform_1, window_bounds = array<i64: 16, 128>}]} {
    %c0 = arith.constant 0 : index
    %c0_0 = arith.constant 0 : index
    %0 = vector.load %arg1[%c0, %c0_0] : memref<16x128xf32, #tpu.memory_space<vmem>>, vector<16x128xf32>
    %1 = tpu.weird %0 : vector<16x128xf32> -> vector<16x128xi1>
    %cst = arith.constant dense<true> : vector<16x128xi1>
    %2 = arith.xori %1, %cst : vector<16x128xi1>
    %cst_1 = arith.constant 9.99999993E-9 : f32
    %3 = vector.broadcast %cst_1 : f32 to vector<16x128xf32>
    %4 = arith.select %2, %0, %3 : vector<16x128xi1>, vector<16x128xf32>
    %cst_2 = arith.constant -5.000000e+01 : f32
    %cst_3 = arith.constant 5.000000e+01 : f32
    %5 = vector.broadcast %cst_2 : f32 to vector<16x128xf32>
    %6 = arith.maximumf %5, %4 : vector<16x128xf32>
    %7 = vector.broadcast %cst_3 : f32 to vector<16x128xf32>
    %8 = arith.minimumf %7, %6 : vector<16x128xf32>
    %cst_4 = arith.constant dense<0xFF800000> : vector<16xf32>
    %9 = vector.multi_reduction <maximumf>, %8, %cst_4 [1] : vector<16x128xf32> to vector<16xf32>
    %10 = vector.shape_cast %9 : vector<16xf32> to vector<16x1xf32>
    %11 = vector.broadcast %10 : vector<16x1xf32> to vector<16x128xf32>
    %12 = arith.subf %8, %11 : vector<16x128xf32>
    %13 = math.exp %12 : vector<16x128xf32>
    %cst_5 = arith.constant dense<0.000000e+00> : vector<16xf32>
    %14 = vector.multi_reduction <add>, %13, %cst_5 [1] : vector<16x128xf32> to vector<16xf32>
    %15 = vector.shape_cast %14 : vector<16xf32> to vector<16x1xf32>
    %16 = tpu.reciprocal %15 : vector<16x1xf32> -> vector<16x1xf32>
    %17 = vector.broadcast %16 : vector<16x1xf32> to vector<16x128xf32>
    %18 = arith.mulf %13, %17 : vector<16x128xf32>
    %cst_6 = arith.constant 9.99999993E-9 : f32
    %cst_7 = arith.constant 1.000000e+00 : f32
    %19 = vector.broadcast %cst_6 : f32 to vector<16x128xf32>
    %20 = arith.maximumf %19, %18 : vector<16x128xf32>
    %21 = vector.broadcast %cst_7 : f32 to vector<16x128xf32>
    %22 = arith.minimumf %21, %20 : vector<16x128xf32>
    %c0_8 = arith.constant 0 : index
    %c0_9 = arith.constant 0 : index
    %23 = vector.load %arg2[%c0_8, %c0_9] : memref<16x128xf32, #tpu.memory_space<vmem>>, vector<16x128xf32>
    tpu.vector_store %arg2[%c0_8, %c0_9], %22 {strides = array<i32>} : memref<16x128xf32, #tpu.memory_space<vmem>>, vector<16x128xf32>,
    return
  }
  func.func @transform_0(%arg0: i32) -> (i32, i32) {
    %c0_i32 = arith.constant 0 : i32
    %c0_i32_0 = arith.constant 0 : i32
    return %arg0, %c0_i32 : i32, i32
  }
  func.func @transform_1(%arg0: i32) -> (i32, i32) {
    %c0_i32 = arith.constant 0 : i32
    %c0_i32_0 = arith.constant 0 : i32
    return %arg0, %c0_i32 : i32, i32
  }
}

</mosaic_0001>

<llo_original>
// kernel: tpu_custom_call.1
$region0: #{tpu_custom_call.1}
  #allocation0 [shape = 'u32[]', space=smem, size = 0x4, offset = 0x4, fixed_abs, tag = 'smem constant byte address 0x4 - core index']
  #allocation1 [shape = 'u32[144,128]{1,0:T(1,128)}', space=vmem, size = 0x12000, scoped, tag = 'internal scratch']
  %s0 = inlined_call_operand.hbm [shape: f32[16,128], index: 0, kind: input, shape index: {}]
  %s1 = inlined_call_operand.hbm [shape: f32[16,128], index: 1, kind: output, shape index: {}]
  %s2 = sld [smem:[#allocation0]]
  $region18: #{tpu_custom_call.1} parent=0
    _
  %s4 = ssub.s32 1, %s2
  %s5 = scalar_select 0, %s4, %s2
  $region1: #{tpu_custom_call.1} parent=0
    #allocation2 [shape = 'u8[8192]{0}', space=vmem, size = 0x2000, scoped, tag = 'input window, operand 0, single buffered']
    #allocation3 [shape = 's32[1]{0}', space=sflag, size = 0x4, scoped, tag = 'scoped memory for tpu_custom_call.1']
    #allocation4 [shape = 's32[1]{0}', space=sflag, size = 0x4, scoped, tag = 'scoped memory for tpu_custom_call.1']
    #allocation5 [shape = 'u8[8192]{0}', space=vmem, size = 0x2000, scoped, tag = 'output window, operand 0, single buffered']
    %6 = vsyncpa [#allocation3], 0
    %7 = vsyncpa [#allocation4], 0
    // Predicated region
    $region2: #{tpu_custom_call.1} parent=1 // pred_check
      _
    $region3: #{tpu_custom_call.1} parent=1 // pred_check_branch
      %9 = sbr.rel (0) target = $region5
    $region4: #{tpu_custom_call.1} parent=1 // pred_region
      %s11 = ssub.s32 256, 256
      %12 = vsyncadd [#allocation3], %s11
      %s13 = sshll.u32 [#allocation2], 4
      %s14 = int_to_ptr.vmem [resolvable:$true] %s13
      %19 = dma.hbm_to_vmem [thread:$0]  %s0, 256, %s14, [#allocation3], 128, 128, 8
    $region5: #{tpu_custom_call.1} parent=1 // pred_fallthru
      _
    // Predicated region
    $region6: #{tpu_custom_call.1} parent=1 // pred_check
      _
    $region7: #{tpu_custom_call.1} parent=1 // pred_check_branch
      %21 = sbr.rel (0) target = $region9
    $region8: #{tpu_custom_call.1} parent=1 // pred_region
      %22 = dma.done [#allocation3], 256
    $region9: #{tpu_custom_call.1} parent=1 // pred_fallthru
      _
    %v23 = vld [vmem:[#allocation2] sm:$0xff]
    %v24 = vld [vmem:[#allocation2 + $0x8] sm:$0xff]
    %vm25 = vweird.f32 %v23
    %vm26 = vweird.f32 %v24
    %vm27 = vmxor %vm25, 1
    %vm28 = vmxor %vm26, 1
    %v29 = vsel %vm27, %v23, 1e-08
    %v30 = vsel %vm28, %v24, 1e-08
    %v31 = vmax.f32 %v29, -50.0
    %v32 = vmax.f32 %v30, -50.0
    %v33 = vmin.f32 %v31, 50.0
    %v34 = vmin.f32 %v32, 50.0
    %35 = vmax.xlane.f32.xlu0 %v33
    %v36 = vpop.xlane.xlu0 %35
    %37 = vmax.xlane.f32.xlu0 %v34
    %v38 = vpop.xlane.xlu0 %37
    %v39 = vsub.f32 %v33, %v36
    %v40 = vsub.f32 %v34, %v38
    %v41 = vmul.f32 %v39, 1.442695
    %v42 = vpow.pop %v41
    %v43 = vmul.f32 %v40, 1.442695
    %v44 = vpow.pop %v43
    %45 = vadd.xlane.f32.xlu0 %v42
    %v46 = vpop.xlane.xlu0 %45
    %47 = vadd.xlane.f32.xlu0 %v44
    %v48 = vpop.xlane.xlu0 %47
    %v49 = vrcp.pop %v46
    %v50 = vrcp.pop %v48
    %v51 = vmul.f32 %v42, %v49
    %v52 = vmul.f32 %v44, %v50
    %v53 = vmax.f32 %v51, 1e-08
    %v54 = vmax.f32 %v52, 1e-08
    %v55 = vmin.f32 %v53, 1.0
    %v56 = vmin.f32 %v54, 1.0
    %57 = vst [vmem:[#allocation5] sm:$0xff] %v55
    %58 = vst [vmem:[#allocation5 + $0x8] sm:$0xff] %v56
    // Predicated region
    $region10: #{tpu_custom_call.1} parent=1 // pred_check
      _
    $region11: #{tpu_custom_call.1} parent=1 // pred_check_branch
      %60 = sbr.rel (0) target = $region13
    $region12: #{tpu_custom_call.1} parent=1 // pred_region
      %s62 = ssub.s32 256, 256
      %63 = vsyncadd [#allocation4], %s62
      %s64 = sshll.u32 [#allocation5], 4
      %s65 = int_to_ptr.vmem [resolvable:$true] %s64
      %70 = dma.vmem_to_hbm [thread:$0]  %s65, 256, %s1, [#allocation4], 128, 128, 8
    $region13: #{tpu_custom_call.1} parent=1 // pred_fallthru
      _
    // Predicated region
    $region14: #{tpu_custom_call.1} parent=1 // pred_check
      _
    $region15: #{tpu_custom_call.1} parent=1 // pred_check_branch
      %72 = sbr.rel (0) target = $region17
    $region16: #{tpu_custom_call.1} parent=1 // pred_region
      %73 = dma.done [#allocation4], 256
    $region17: #{tpu_custom_call.1} parent=1 // pred_fallthru
      _
    %74 = vsyncpa [#allocation3], 1
    %75 = vsyncpa [#allocation4], 1

</llo_original>
